<compile_context>
chip_gen: v6e
topology: v6e:2x2x1
jax: 0.10.0
libtpu: 0.0.40
codegen_flags: <defaults>
</compile_context>

<pallas_src>
import jax
import jax.numpy as jnp
from jax.experimental import pallas as pl
from jax.experimental.pallas import tpu as pltpu


def _round_up(n, m):
    return ((n + m - 1) // m) * m


def _cdiv(a, b):
    return -(-a // b)


# --------------------------------------------------------------------------- #
# Kernel body
# --------------------------------------------------------------------------- #
def _c51_head_kernel(x_ref, w1_ref, b1_ref, w2_ref, b2_ref, out_ref):
    x = x_ref[...]
    if x.dtype != w1_ref.dtype:            # only emitted on the bf16-weight path
        x = x.astype(w1_ref.dtype)
    # Layer 1: MXU matmul with f32 accumulation; bias + ReLU in f32 on the VPU.
    h = jnp.dot(x, w1_ref[...], preferred_element_type=jnp.float32)
    h = jnp.maximum(h + b1_ref[...], 0.0)
    if h.dtype != w2_ref.dtype:            # only emitted on the bf16-weight path
        h = h.astype(w2_ref.dtype)
    # Layer 2.
    q = jnp.dot(h, w2_ref[...], preferred_element_type=jnp.float32)
    out_ref[...] = (q + b2_ref[...]).astype(out_ref.dtype)


# --------------------------------------------------------------------------- #
# One-time parameter preparation (padding done once, NOT per forward call)
# --------------------------------------------------------------------------- #
def prepare_c51_head_params(w1, b1, w2, b2, *, compute_dtype=None):
    """w1: (H, H2), b1: (H2,), w2: (H2, O), b2: (O,), stored (in, out).

    Pads the H2 (= hidden//2) dim up to a multiple of 128 so the intermediate
    and the first matmul are lane-dense.  Optionally casts weights to
    `compute_dtype` (e.g. bf16 for the v6e/v7x MXU fast path); biases stay f32.
    """
    H, H2 = w1.shape
    assert w2.shape[0] == H2
    O = w2.shape[1]
    H2p = _round_up(max(H2, 128), 128)
    wdt = compute_dtype if compute_dtype is not None else w1.dtype
    w1p = jnp.pad(w1.astype(wdt), ((0, 0), (0, H2p - H2)))
    b1p = jnp.pad(b1.astype(jnp.float32), (0, H2p - H2)).reshape(1, H2p)
    w2p = jnp.pad(w2.astype(wdt), ((0, H2p - H2), (0, 0)))
    b2p = b2.astype(jnp.float32).reshape(1, O)
    return w1p, b1p, w2p, b2p


# --------------------------------------------------------------------------- #
# Batch-tile heuristic
# --------------------------------------------------------------------------- #
def _pick_tm(B, H, itemsize, *, tm_max=512, target_steps=8):
    tm_max = max(8, (tm_max // 8) * 8)          # sublane-aligned cap (robustness fix)
    if B <= 128:
        # Small batch: split into 2 tiles when big enough to matter so v7x's
        # two TensorCores both get work; otherwise a single tile.
        tm = _round_up(_cdiv(B, 2), 8) if B > 64 else _round_up(B, 8)
    else:
        # Aim for ~target_steps pipelined grid steps (DMA/compute overlap).
        tm = max(128, _round_up(_cdiv(B, target_steps), 8))
    # Keep the double-buffered x tile under ~16 MiB so weights stay resident.
    cap = max(8, ((16 << 20) // max(1, 2 * H * itemsize)) // 8 * 8)
    tm = min(tm, tm_max, cap, _round_up(B, 8))
    return max(tm, 8)


# --------------------------------------------------------------------------- #
# Forward wrapper
# --------------------------------------------------------------------------- #
def c51_reward_head(x, w1p, b1p, w2p, b2p, num_objectives, num_atoms, *, tm_max=512):
    """x: (..., hidden).  Prepared (padded) params from prepare_c51_head_params.
    Returns (-1, num_objectives, num_atoms) logits (no softmax in forward)."""
    x = x.reshape(-1, x.shape[-1])              # matches the module's view(-1, ...)
    B, H = x.shape
    assert w1p.shape[0] == H
    H2p = w1p.shape[1]
    O = w2p.shape[1]
    assert O == num_objectives * num_atoms

    itemsize_x = jnp.dtype(x.dtype).itemsize
    itemsize_w = jnp.dtype(w1p.dtype).itemsize

    TM = _pick_tm(B, H, itemsize_x, tm_max=tm_max)
    grid = (pl.cdiv(B, TM),)                    # ragged tail tile handled by Pallas

    # VMEM budget: double-buffered x/out tiles + single-buffered weights/biases
    # + the f32 intermediate, with headroom, clamped to the chip's capacity.
    vmem_needed = (
        2 * TM * H * itemsize_x                 # x tiles (double-buffered)
        + 2 * TM * O * itemsize_x               # out tiles (double-buffered)
        + (H * H2p + H2p * O) * itemsize_w      # weights (single-buffered)
        + (H2p + O) * 4                         # biases (f32)
        + TM * H2p * 4                          # intermediate h (f32)
    )
    try:
        vmem_cap = int(pltpu.get_tpu_info().vmem_capacity_bytes)
    except Exception:
        vmem_cap = 64 << 20                     # conservative (v7x per-TC)
    vmem_limit = min(max(int(vmem_needed * 1.5) + (4 << 20), 32 << 20), vmem_cap)

    cost = pl.CostEstimate(
        flops=2 * B * (H * H2p + H2p * O),
        transcendentals=0,
        bytes_accessed=(
            x.size * itemsize_x
            + (w1p.size + w2p.size) * itemsize_w
            + (b1p.size + b2p.size) * 4
            + B * O * itemsize_x
        ),
    )

    # Weights/biases have a constant block index -> one buffer is enough.
    single = pl.Buffered(1)

    q = pl.pallas_call(
        _c51_head_kernel,
        out_shape=jax.ShapeDtypeStruct((B, O), x.dtype),
        grid=grid,
        in_specs=[
            pl.BlockSpec((TM, H), lambda i: (i, 0)),     # activations: pipelined per step
            pl.BlockSpec((H, H2p), lambda i: (0, 0), pipeline_mode=single),
            pl.BlockSpec((1, H2p), lambda i: (0, 0), pipeline_mode=single),
            pl.BlockSpec((H2p, O), lambda i: (0, 0), pipeline_mode=single),
            pl.BlockSpec((1, O), lambda i: (0, 0), pipeline_mode=single),
        ],
        # Full-extent last dim (= O): no output padding, no post-kernel slice.
        out_specs=pl.BlockSpec((TM, O), lambda i: (i, 0)),
        compiler_params=pltpu.CompilerParams(
            dimension_semantics=("parallel",),           # shard batch tiles across TCs (v7x)
            vmem_limit_bytes=vmem_limit,
        ),
        cost_estimate=cost,
    )(x, w1p, b1p, w2p, b2p)

    return q.reshape(-1, num_objectives, num_atoms)      # free view, no copy pass


# --------------------------------------------------------------------------- #
# Deterministic init matching nn.Linear's uniform(-1/sqrt(fan_in), 1/sqrt(fan_in))
# --------------------------------------------------------------------------- #
def init_params(key, hidden_size, num_objectives, num_atoms, dtype=jnp.float32):
    h2 = hidden_size // 2
    out_dim = num_objectives * num_atoms
    k1, k2, k3, k4 = jax.random.split(key, 4)
    bound1 = 1.0 / (hidden_size ** 0.5)
    bound2 = 1.0 / (h2 ** 0.5)
    # stored as (in_features, out_features)
    w1 = jax.random.uniform(k1, (hidden_size, h2), dtype, -bound1, bound1)
    b1 = jax.random.uniform(k2, (h2,), dtype, -bound1, bound1)
    w2 = jax.random.uniform(k3, (h2, out_dim), dtype, -bound2, bound2)
    b2 = jax.random.uniform(k4, (out_dim,), dtype, -bound2, bound2)
    return w1, b1, w2, b2


if __name__ == "__main__":
    hidden_size = 32
    num_objectives = 3
    num_atoms = 5
    batch = 8

    key = jax.random.PRNGKey(0)
    kx, kp = jax.random.split(key)
    x = jax.random.normal(kx, (batch, hidden_size), jnp.float32)
    w1, b1, w2, b2 = init_params(kp, hidden_size, num_objectives, num_atoms)

    # Pad / lay out weights ONCE (init-time, not per forward).
    w1p, b1p, w2p, b2p = prepare_c51_head_params(w1, b1, w2, b2)

    out = c51_reward_head(x, w1p, b1p, w2p, b2p, num_objectives, num_atoms)
    out = jax.block_until_ready(out)

    # reference check in plain JAX (unpadded params)
    ref = jnp.maximum(x @ w1 + b1, 0.0) @ w2 + b2
    ref = ref.reshape(-1, num_objectives, num_atoms)
    assert out.shape == (batch, num_objectives, num_atoms)
    assert jnp.allclose(out, ref, atol=1e-5, rtol=1e-5)

    print("KERNEL_OK")
</pallas_src>

<mosaic_0001>
module attributes {stable_mosaic.version = 11 : i64} {
  func.func @_c51_head_kernel(%arg0: i32, %arg1: memref<8x32xf32, #tpu.memory_space<vmem>>, %arg2: memref<32x128xf32, #tpu.memory_space<vmem>>, %arg3: memref<1x128xf32, #tpu.memory_space<vmem>>, %arg4: memref<128x15xf32, #tpu.memory_space<vmem>>, %arg5: memref<1x15xf32, #tpu.memory_space<vmem>>, %arg6: memref<8x15xf32, #tpu.memory_space<vmem>>) attributes {dimension_semantics = [#tpu.dimension_semantics<parallel>], iteration_bounds = array<i64: 1>, scalar_prefetch = 0 : i64, scratch_operands = 0 : i64, tpu.core_type = #tpu.core_type<tc>, window_params = [{transform_indices = @transform_0, window_bounds = array<i64: 8, 32>}, {pipeline_mode = #tpu.pipeline_mode<synchronous>, transform_indices = @transform_1, window_bounds = array<i64: 32, 128>}, {pipeline_mode = #tpu.pipeline_mode<synchronous>, transform_indices = @transform_2, window_bounds = array<i64: 1, 128>}, {pipeline_mode = #tpu.pipeline_mode<synchronous>, transform_indices = @transform_3, window_bounds = array<i64: 128, 15>}, {pipeline_mode = #tpu.pipeline_mode<synchronous>, transform_indices = @transform_4, window_bounds = array<i64: 1, 15>}, {transform_indices = @transform_5, window_bounds = array<i64: 8, 15>}]} {
    %c0 = arith.constant 0 : index
    %c0_0 = arith.constant 0 : index
    %0 = vector.load %arg1[%c0, %c0_0] : memref<8x32xf32, #tpu.memory_space<vmem>>, vector<8x32xf32>
    %c0_1 = arith.constant 0 : index
    %c0_2 = arith.constant 0 : index
    %1 = vector.load %arg2[%c0_1, %c0_2] : memref<32x128xf32, #tpu.memory_space<vmem>>, vector<32x128xf32>
    %cst = arith.constant dense<0.000000e+00> : vector<8x128xf32>
    %2 = tpu.matmul %0, %1, %cst {dimension_numbers = #tpu.dot_dimension_numbers<[1], [0], [0], [1], [0, 0, 1, 1], [], []>} : vector<8x32xf32>, vector<32x128xf32>, vector<8x128xf32> -> vector<8x128xf32>
    %c0_3 = arith.constant 0 : index
    %c0_4 = arith.constant 0 : index
    %3 = vector.load %arg3[%c0_3, %c0_4] : memref<1x128xf32, #tpu.memory_space<vmem>>, vector<1x128xf32>
    %4 = vector.broadcast %3 : vector<1x128xf32> to vector<8x128xf32>
    %5 = arith.addf %2, %4 : vector<8x128xf32>
    %cst_5 = arith.constant 0.000000e+00 : f32
    %6 = vector.broadcast %cst_5 : f32 to vector<8x128xf32>
    %7 = arith.maximumf %5, %6 : vector<8x128xf32>
    %c0_6 = arith.constant 0 : index
    %c0_7 = arith.constant 0 : index
    %8 = vector.load %arg4[%c0_6, %c0_7] : memref<128x15xf32, #tpu.memory_space<vmem>>, vector<128x15xf32>
    %cst_8 = arith.constant dense<0.000000e+00> : vector<8x15xf32>
    %9 = tpu.matmul %7, %8, %cst_8 {dimension_numbers = #tpu.dot_dimension_numbers<[1], [0], [0], [1], [0, 0, 1, 1], [], []>} : vector<8x128xf32>, vector<128x15xf32>, vector<8x15xf32> -> vector<8x15xf32>
    %c0_9 = arith.constant 0 : index
    %c0_10 = arith.constant 0 : index
    %10 = vector.load %arg5[%c0_9, %c0_10] : memref<1x15xf32, #tpu.memory_space<vmem>>, vector<1x15xf32>
    %11 = vector.broadcast %10 : vector<1x15xf32> to vector<8x15xf32>
    %12 = arith.addf %9, %11 : vector<8x15xf32>
    %c0_11 = arith.constant 0 : index
    %c0_12 = arith.constant 0 : index
    %13 = vector.load %arg6[%c0_11, %c0_12] : memref<8x15xf32, #tpu.memory_space<vmem>>, vector<8x15xf32>
    tpu.vector_store %arg6[%c0_11, %c0_12], %12 {strides = array<i32>} : memref<8x15xf32, #tpu.memory_space<vmem>>, vector<8x15xf32>,
    return
  }
  func.func @transform_0(%arg0: i32) -> (i32, i32) {
    %c0_i32 = arith.constant 0 : i32
    %c0_i32_0 = arith.constant 0 : i32
    return %arg0, %c0_i32 : i32, i32
  }
  func.func @transform_1(%arg0: i32) -> (i32, i32) {
    %c0_i32 = arith.constant 0 : i32
    %c0_i32_0 = arith.constant 0 : i32
    %c0_i32_1 = arith.constant 0 : i32
    return %c0_i32, %c0_i32_0 : i32, i32
  }
  func.func @transform_2(%arg0: i32) -> (i32, i32) {
    %c0_i32 = arith.constant 0 : i32
    %c0_i32_0 = arith.constant 0 : i32
    %c0_i32_1 = arith.constant 0 : i32
    return %c0_i32, %c0_i32_0 : i32, i32
  }
  func.func @transform_3(%arg0: i32) -> (i32, i32) {
    %c0_i32 = arith.constant 0 : i32
    %c0_i32_0 = arith.constant 0 : i32
    %c0_i32_1 = arith.constant 0 : i32
    return %c0_i32, %c0_i32_0 : i32, i32
  }
  func.func @transform_4(%arg0: i32) -> (i32, i32) {
    %c0_i32 = arith.constant 0 : i32
    %c0_i32_0 = arith.constant 0 : i32
    %c0_i32_1 = arith.constant 0 : i32
    return %c0_i32, %c0_i32_0 : i32, i32
  }
  func.func @transform_5(%arg0: i32) -> (i32, i32) {
    %c0_i32 = arith.constant 0 : i32
    %c0_i32_0 = arith.constant 0 : i32
    return %arg0, %c0_i32 : i32, i32
  }
}

</mosaic_0001>

<llo_original>
// kernel: tpu_custom_call.1
$region0: #{tpu_custom_call.1}
  #allocation0 [shape = 'u32[]', space=smem, size = 0x4, offset = 0x4, fixed_abs, tag = 'smem constant byte address 0x4 - core index']
  #allocation1 [shape = 'u32[144,128]{1,0:T(1,128)}', space=vmem, size = 0x12000, scoped, tag = 'internal scratch']
  %s0 = inlined_call_operand.vmem [shape: f32[8,32], index: 0, kind: input, shape index: {}]
  %s1 = inlined_call_operand.vmem [shape: f32[32,128], index: 1, kind: input, shape index: {}]
  %s2 = inlined_call_operand.vmem [shape: f32[1,128], index: 2, kind: input, shape index: {}]
  %s3 = inlined_call_operand.vmem [shape: f32[128,15], index: 3, kind: input, shape index: {}]
  %s4 = inlined_call_operand.vmem [shape: f32[1,15], index: 4, kind: input, shape index: {}]
  %s5 = inlined_call_operand.hbm [shape: f32[8,15], index: 5, kind: output, shape index: {}]
  %s6 = sld [smem:[#allocation0]]
  $region30: #{tpu_custom_call.1} parent=0
    _
  %s8 = ssub.s32 1, %s6
  %s9 = scalar_select 0, %s8, %s6
  $region1: #{tpu_custom_call.1} parent=0
    #allocation2 [shape = 'u8[4096]{0}', space=vmem, size = 0x1000, scoped, tag = 'output window, operand 0, single buffered']
    #allocation3 [shape = 's32[1]{0}', space=sflag, size = 0x4, scoped, tag = 'scoped memory for tpu_custom_call.1']
    %10 = vsyncpa [#allocation3], 0
    // Predicated region
    $region2: #{tpu_custom_call.1} parent=1 // pred_check
      _
    $region3: #{tpu_custom_call.1} parent=1 // pred_check_branch
      %12 = sbr.rel (0) target = $region5
    $region4: #{tpu_custom_call.1} parent=1 // pred_region
      _
    $region5: #{tpu_custom_call.1} parent=1 // pred_fallthru
      _
    // Predicated region
    $region6: #{tpu_custom_call.1} parent=1 // pred_check
      _
    $region7: #{tpu_custom_call.1} parent=1 // pred_check_branch
      %14 = sbr.rel (0) target = $region9
    $region8: #{tpu_custom_call.1} parent=1 // pred_region
      _
    $region9: #{tpu_custom_call.1} parent=1 // pred_fallthru
      _
    // Predicated region
    $region10: #{tpu_custom_call.1} parent=1 // pred_check
      _
    $region11: #{tpu_custom_call.1} parent=1 // pred_check_branch
      %16 = sbr.rel (0) target = $region13
    $region12: #{tpu_custom_call.1} parent=1 // pred_region
      _
    $region13: #{tpu_custom_call.1} parent=1 // pred_fallthru
      _
    // Predicated region
    $region14: #{tpu_custom_call.1} parent=1 // pred_check
      _
    $region15: #{tpu_custom_call.1} parent=1 // pred_check_branch
      %18 = sbr.rel (0) target = $region17
    $region16: #{tpu_custom_call.1} parent=1 // pred_region
      _
    $region17: #{tpu_custom_call.1} parent=1 // pred_fallthru
      _
    // Predicated region
    $region18: #{tpu_custom_call.1} parent=1 // pred_check
      _
    $region19: #{tpu_custom_call.1} parent=1 // pred_check_branch
      %20 = sbr.rel (0) target = $region21
    $region20: #{tpu_custom_call.1} parent=1 // pred_region
      _
    $region21: #{tpu_custom_call.1} parent=1 // pred_fallthru
      _
    %v21 = vld [vmem:[%s0] sm:$0xff]
    %v22 = vld [vmem:[%s1] sm:$0xff]
    %v23 = vld [vmem:[%s1 + $0x8] sm:$0xff]
    %v24 = vld [vmem:[%s1 + $0x10] sm:$0xff]
    %v25 = vld [vmem:[%s1 + $0x18] sm:$0xff]
    %v26 = vld [vmem:[%s2] sm:$0x1]
    %v28 = vlaneseq
    %v29 = vshrl.u32 %v28, 7
    %v30 = vsub.s32 0, %v29
    %v31 = vrot.slane %v26, %v30
    %vm33 = vcmask 261120
    %v35 = vsel %vm33, %v21, 0
    %37 = vmatprep.subr.mxu0 0.0
    %38 = vmatpush1.msra.mxu0 0.0
    %39 = vmatprep.subr.mxu0 0.0
    %40 = vmatpush1.msra.mxu0 0.0
    %41 = vmatprep.subr.mxu0 0.0
    %42 = vmatpush1.msra.mxu0 0.0
    %43 = vmatprep.subr.mxu0 0.0
    %44 = vmatpush1.msra.mxu0 0.0
    %45 = vmatprep.subr.mxu0 0.0
    %46 = vmatpush1.msra.mxu0 0.0
    %47 = vmatprep.subr.mxu0 0.0
    %48 = vmatpush1.msra.mxu0 0.0
    %49 = vmatprep.subr.mxu0 0.0
    %50 = vmatpush1.msra.mxu0 0.0
    %51 = vmatprep.subr.mxu0 0.0
    %52 = vmatpush1.msra.mxu0 0.0
    %53 = vmatprep.subr.mxu0 0.0
    %54 = vmatpush1.msra.mxu0 0.0
    %55 = vmatprep.subr.mxu0 0.0
    %56 = vmatpush1.msra.mxu0 0.0
    %57 = vmatprep.subr.mxu0 0.0
    %58 = vmatpush1.msra.mxu0 0.0
    %59 = vmatprep.subr.mxu0 0.0
    %60 = vmatpush1.msra.mxu0 0.0
    %61 = vmatprep.subr.mxu0 0.0
    %62 = vmatpush1.msra.mxu0 %v25
    %63 = vmatprep.subr.mxu0 0.0
    %64 = vmatpush1.msra.mxu0 %v24
    %65 = vmatprep.subr.mxu0 0.0
    %66 = vmatpush1.msra.mxu0 %v23
    %67 = vmatprep.subr.mxu0 0.0
    %68 = vmatpush1.msra.mxu0 %v22
    %69 = vmatprep.subr.mxu0 0.0
    %70 = vmatpush2.msra.mxu0 0.0
    %71 = vmatprep.subr.mxu0 0.0
    %72 = vmatpush2.msra.mxu0 0.0
    %73 = vmatprep.subr.mxu0 0.0
    %74 = vmatpush2.msra.mxu0 0.0
    %75 = vmatprep.subr.mxu0 0.0
    %76 = vmatpush2.msra.mxu0 0.0
    %77 = vmatprep.subr.mxu0 0.0
    %78 = vmatpush2.msra.mxu0 0.0
    %79 = vmatprep.subr.mxu0 0.0
    %80 = vmatpush2.msra.mxu0 0.0
    %81 = vmatprep.subr.mxu0 0.0
    %82 = vmatpush2.msra.mxu0 0.0
    %83 = vmatprep.subr.mxu0 0.0
    %84 = vmatpush2.msra.mxu0 0.0
    %85 = vmatprep.subr.mxu0 0.0
    %86 = vmatpush2.msra.mxu0 0.0
    %87 = vmatprep.subr.mxu0 0.0
    %88 = vmatpush2.msra.mxu0 0.0
    %89 = vmatprep.subr.mxu0 0.0
    %90 = vmatpush2.msra.mxu0 0.0
    %91 = vmatprep.subr.mxu0 0.0
    %92 = vmatpush2.msra.mxu0 0.0
    %93 = vmatprep.subr.mxu0 0.0
    %94 = vmatpush2.msra.mxu0 0.0
    %95 = vmatprep.subr.mxu0 0.0
    %96 = vmatpush2.msra.mxu0 0.0
    %97 = vmatprep.subr.mxu0 0.0
    %98 = vmatpush2.msra.mxu0 0.0
    %99 = vmatprep.subr.mxu0 0.0
    %100 = vmatpush2.msra.mxu0 0.0
    %101 = vmatprep.mubr.f32.mxu0 0.0
    %102 = vmatmul.mubr.f32.gmra.mxu0 %v35
    %v103 = vpop.f32.mrf.mxu0
    %v104 = vadd.f32 %v31, %v103
    %v105 = vpop.f32.mrf.mxu0
    %106 = vdwg.mxu0
    %v107 = vmax.f32 %v104, 0.0
    %v108 = vld [vmem:[%s3] sm:$0xff]
    %v109 = vld [vmem:[%s3 + $0x8] sm:$0xff]
    %v110 = vld [vmem:[%s3 + $0x10] sm:$0xff]
    %v111 = vld [vmem:[%s3 + $0x18] sm:$0xff]
    %v112 = vld [vmem:[%s3 + $0x20] sm:$0xff]
    %v113 = vld [vmem:[%s3 + $0x28] sm:$0xff]
    %v114 = vld [vmem:[%s3 + $0x30] sm:$0xff]
    %v115 = vld [vmem:[%s3 + $0x38] sm:$0xff]
    %v116 = vld [vmem:[%s3 + $0x40] sm:$0xff]
    %v117 = vld [vmem:[%s3 + $0x48] sm:$0xff]
    %v118 = vld [vmem:[%s3 + $0x50] sm:$0xff]
    %v119 = vld [vmem:[%s3 + $0x58] sm:$0xff]
    %v120 = vld [vmem:[%s3 + $0x60] sm:$0xff]
    %v121 = vld [vmem:[%s3 + $0x68] sm:$0xff]
    %v122 = vld [vmem:[%s3 + $0x70] sm:$0xff]
    %v123 = vld [vmem:[%s3 + $0x78] sm:$0xff]
    %v124 = vld [vmem:[%s4] sm:$0x1]
    %v126 = vlaneseq
    %v127 = vshrl.u32 %v126, 7
    %v128 = vsub.s32 0, %v127
    %v129 = vrot.slane %v124, %v128
    %131 = vmatprep.subr.mxu0 0.0
    %132 = vmatpush1.msra.mxu0 %v123
    %133 = vmatprep.subr.mxu0 0.0
    %134 = vmatpush1.msra.mxu0 %v122
    %135 = vmatprep.subr.mxu0 0.0
    %136 = vmatpush1.msra.mxu0 %v121
    %137 = vmatprep.subr.mxu0 0.0
    %138 = vmatpush1.msra.mxu0 %v120
    %139 = vmatprep.subr.mxu0 0.0
    %140 = vmatpush1.msra.mxu0 %v119
    %141 = vmatprep.subr.mxu0 0.0
    %142 = vmatpush1.msra.mxu0 %v118
    %143 = vmatprep.subr.mxu0 0.0
    %144 = vmatpush1.msra.mxu0 %v117
    %145 = vmatprep.subr.mxu0 0.0
    %146 = vmatpush1.msra.mxu0 %v116
    %147 = vmatprep.subr.mxu0 0.0
    %148 = vmatpush1.msra.mxu0 %v115
    %149 = vmatprep.subr.mxu0 0.0
    %150 = vmatpush1.msra.mxu0 %v114
    %151 = vmatprep.subr.mxu0 0.0
    %152 = vmatpush1.msra.mxu0 %v113
    %153 = vmatprep.subr.mxu0 0.0
    %154 = vmatpush1.msra.mxu0 %v112
    %155 = vmatprep.subr.mxu0 0.0
    %156 = vmatpush1.msra.mxu0 %v111
    %157 = vmatprep.subr.mxu0 0.0
    %158 = vmatpush1.msra.mxu0 %v110
    %159 = vmatprep.subr.mxu0 0.0
    %160 = vmatpush1.msra.mxu0 %v109
    %161 = vmatprep.subr.mxu0 0.0
    %162 = vmatpush1.msra.mxu0 %v108
    %163 = vmatprep.subr.mxu0 0.0
    %164 = vmatpush2.msra.mxu0 0.0
    %165 = vmatprep.subr.mxu0 0.0
    %166 = vmatpush2.msra.mxu0 0.0
    %167 = vmatprep.subr.mxu0 0.0
    %168 = vmatpush2.msra.mxu0 0.0
    %169 = vmatprep.subr.mxu0 0.0
    %170 = vmatpush2.msra.mxu0 0.0
    %171 = vmatprep.subr.mxu0 0.0
    %172 = vmatpush2.msra.mxu0 0.0
    %173 = vmatprep.subr.mxu0 0.0
    %174 = vmatpush2.msra.mxu0 0.0
    %175 = vmatprep.subr.mxu0 0.0
    %176 = vmatpush2.msra.mxu0 0.0
    %177 = vmatprep.subr.mxu0 0.0
    %178 = vmatpush2.msra.mxu0 0.0
    %179 = vmatprep.subr.mxu0 0.0
    %180 = vmatpush2.msra.mxu0 0.0
    %181 = vmatprep.subr.mxu0 0.0
    %182 = vmatpush2.msra.mxu0 0.0
    %183 = vmatprep.subr.mxu0 0.0
    %184 = vmatpush2.msra.mxu0 0.0
    %185 = vmatprep.subr.mxu0 0.0
    %186 = vmatpush2.msra.mxu0 0.0
    %187 = vmatprep.subr.mxu0 0.0
    %188 = vmatpush2.msra.mxu0 0.0
    %189 = vmatprep.subr.mxu0 0.0
    %190 = vmatpush2.msra.mxu0 0.0
    %191 = vmatprep.subr.mxu0 0.0
    %192 = vmatpush2.msra.mxu0 0.0
    %193 = vmatprep.subr.mxu0 0.0
    %194 = vmatpush2.msra.mxu0 0.0
    %195 = vmatprep.mubr.f32.mxu0 0.0
    %196 = vmatmul.mubr.f32.gmra.mxu0 %v107
    %v197 = vpop.f32.mrf.mxu0
    %v198 = vadd.f32 %v129, %v197
    %v199 = vpop.f32.mrf.mxu0
    %200 = vdwg.mxu0
    %vm201 = vcmask 121856
    %202 = vst.msk [vmem:[#allocation2] sm:$0xff] %vm201, %v198
    // Predicated region
    $region22: #{tpu_custom_call.1} parent=1 // pred_check
      _
    $region23: #{tpu_custom_call.1} parent=1 // pred_check_branch
      %204 = sbr.rel (0) target = $region25
    $region24: #{tpu_custom_call.1} parent=1 // pred_region
      %s206 = ssub.s32 128, 128
      %207 = vsyncadd [#allocation3], %s206
      %s209 = sshll.u32 [#allocation2], 4
      %s210 = int_to_ptr.vmem [resolvable:$true] %s209
      %212 = dma.vmem_to_hbm [thread:$0]  %s210, 128, %s5, [#allocation3]
    $region25: #{tpu_custom_call.1} parent=1 // pred_fallthru
      _
    // Predicated region
    $region26: #{tpu_custom_call.1} parent=1 // pred_check
      _
    $region27: #{tpu_custom_call.1} parent=1 // pred_check_branch
      %214 = sbr.rel (0) target = $region29
    $region28: #{tpu_custom_call.1} parent=1 // pred_region
      %215 = dma.done [#allocation3], 128
    $region29: #{tpu_custom_call.1} parent=1 // pred_fallthru
      _
    %216 = vsyncpa [#allocation3], 1

</llo_original>
